<compile_context>
chip_gen: v7x
topology: tpu7x:2x2x1
jax: 0.10.0
libtpu: 0.0.40
codegen_flags: <defaults>
</compile_context>

<pallas_src>
import functools
import math

import jax
import jax.numpy as jnp
from jax.experimental import pallas as pl
from jax.experimental.pallas import tpu as pltpu

_TM_MAX = 256            # row tile
_TN_MAX = 512            # output-column tile
_TK_MAX = 512            # reduction tile
_VMEM_LIMIT = 32 * 1024 * 1024
_MM_SEM = ("parallel", "parallel", "arbitrary")


# ----------------------------------------------------------------------------
# Small helpers (padding / tiling)
# ----------------------------------------------------------------------------
def _round_up(x, m):
    return (x + m - 1) // m * m


def _tile_pad(dim, max_tile, align):
    """Pick a tile (multiple of `align`, <= max_tile) and the padded extent."""
    t = min(max_tile, _round_up(dim, align))
    return t, _round_up(dim, t)


def _pad2(a, rows, cols):
    r, c = a.shape
    if r == rows and c == cols:
        return a
    return jnp.pad(a, ((0, rows - r), (0, cols - c)))


def _gelu_tanh(x):
    return 0.5 * x * (1.0 + jnp.tanh(0.7978845608028654 * (x + 0.044715 * x * x * x)))


# ----------------------------------------------------------------------------
# Pallas kernels
# ----------------------------------------------------------------------------
def _matmul_kernel(x_ref, w_ref, b_ref, o_ref, acc_ref, *, act, nk):
    """Tiled matmul with f32 accumulator; bias + activation fused into finalize."""
    @pl.when(pl.program_id(2) == 0)
    def _():
        acc_ref[...] = jnp.zeros_like(acc_ref)

    acc_ref[...] += jnp.dot(x_ref[...], w_ref[...],
                            preferred_element_type=jnp.float32)

    @pl.when(pl.program_id(2) == nk - 1)
    def _():
        y = acc_ref[...] + b_ref[...]
        if act == "quick_gelu":          # CLIP vision MLP activation
            y = y * jax.nn.sigmoid(1.702 * y)
        elif act == "gelu":
            y = _gelu_tanh(y)
        elif act == "silu":
            y = y * jax.nn.sigmoid(y)
        o_ref[...] = y.astype(o_ref.dtype)


def _down_silu_kernel(g_ref, u_ref, w_ref, o_ref, acc_ref, *, nk):
    """LLaMA down projection; silu(gate)*up is recomputed per K tile (VPU filler)."""
    @pl.when(pl.program_id(2) == 0)
    def _():
        acc_ref[...] = jnp.zeros_like(acc_ref)

    g = g_ref[...].astype(jnp.float32)
    u = u_ref[...].astype(jnp.float32)
    h = (g * jax.nn.sigmoid(g) * u).astype(w_ref.dtype)
    acc_ref[...] += jnp.dot(h, w_ref[...], preferred_element_type=jnp.float32)

    @pl.when(pl.program_id(2) == nk - 1)
    def _():
        o_ref[...] = acc_ref[...].astype(o_ref.dtype)


def _flash_kernel(q_ref, k_ref, v_ref, o_ref, m_sc, l_sc, acc_sc,
                  *, scale, causal, kv_len, tq, tkv):
    """Flash attention with online softmax; causal / kv-length mask built in-kernel."""
    qi = pl.program_id(1)
    ki = pl.program_id(2)

    @pl.when(ki == 0)
    def _():
        m_sc[...] = jnp.full_like(m_sc, -1e30)
        l_sc[...] = jnp.zeros_like(l_sc)
        acc_sc[...] = jnp.zeros_like(acc_sc)

    def _process():
        s = jax.lax.dot_general(q_ref[0], k_ref[0], (((1,), (1,)), ((), ())),
                                preferred_element_type=jnp.float32) * scale
        kpos = ki * tkv + jax.lax.broadcasted_iota(jnp.int32, (tq, tkv), 1)
        mask = kpos < kv_len
        if causal:
            qpos = qi * tq + jax.lax.broadcasted_iota(jnp.int32, (tq, tkv), 0)
            mask = jnp.logical_and(mask, qpos >= kpos)
        s = jnp.where(mask, s, -1e30)

        m_prev = m_sc[...]
        m_new = jnp.maximum(m_prev, jnp.max(s, axis=-1, keepdims=True))
        alpha = jnp.exp(m_prev - m_new)
        p = jnp.exp(s - m_new)
        l_sc[...] = alpha * l_sc[...] + jnp.sum(p, axis=-1, keepdims=True)
        acc_sc[...] = alpha * acc_sc[...] + jnp.dot(
            p.astype(v_ref.dtype), v_ref[0], preferred_element_type=jnp.float32)
        m_sc[...] = m_new

    if causal:
        # Skip kv blocks that are entirely above the causal diagonal for this q tile.
        pl.when(ki * tkv <= qi * tq + (tq - 1))(_process)
    else:
        _process()

    @pl.when(ki == pl.num_programs(2) - 1)
    def _():
        o_ref[0] = (acc_sc[...] * pl.reciprocal(l_sc[...], approx=True)
                    ).astype(o_ref.dtype)


def _layernorm_kernel(x_ref, g_ref, b_ref, o_ref, *, eps):
    x = x_ref[...].astype(jnp.float32)
    mu = jnp.mean(x, axis=-1, keepdims=True)
    xc = x - mu
    var = jnp.mean(xc * xc, axis=-1, keepdims=True)
    y = xc * jax.lax.rsqrt(var + eps)
    o_ref[...] = (y * g_ref[...] + b_ref[...]).astype(o_ref.dtype)


def _rmsnorm_kernel(x_ref, g_ref, o_ref, *, eps):
    x = x_ref[...].astype(jnp.float32)
    var = jnp.mean(x * x, axis=-1, keepdims=True)
    o_ref[...] = (x * jax.lax.rsqrt(var + eps) * g_ref[...]).astype(o_ref.dtype)


# ----------------------------------------------------------------------------
# Pallas-call wrappers
# ----------------------------------------------------------------------------
def _matmul_call(xp, wp, bp, *, act, out_dtype, tm, tn, tk):
    """xp: [Mp, Kp], wp: [Kp, Np], bp: [1, Np] f32 -> padded [Mp, Np]."""
    Mp, Kp = xp.shape
    Np = wp.shape[1]
    nk = Kp // tk
    return pl.pallas_call(
        functools.partial(_matmul_kernel, act=act, nk=nk),
        out_shape=jax.ShapeDtypeStruct((Mp, Np), out_dtype),
        grid=(Mp // tm, Np // tn, nk),
        in_specs=[pl.BlockSpec((tm, tk), lambda i, j, k: (i, k)),
                  pl.BlockSpec((tk, tn), lambda i, j, k: (k, j)),
                  pl.BlockSpec((1, tn), lambda i, j, k: (0, j))],
        out_specs=pl.BlockSpec((tm, tn), lambda i, j, k: (i, j)),
        scratch_shapes=[pltpu.VMEM((tm, tn), jnp.float32)],
        compiler_params=pltpu.CompilerParams(
            dimension_semantics=_MM_SEM, vmem_limit_bytes=_VMEM_LIMIT),
    )(xp, wp, bp)


def linear(x, w, b=None, act="none", out_dtype=None):
    """x: [M, K], w: [K, N], b: [N] or None -> [M, N] (K/N-tiled, padded as needed)."""
    M, K = x.shape
    N = w.shape[1]
    out_dtype = out_dtype or x.dtype
    tm, Mp = _tile_pad(M, _TM_MAX, 8)
    tk, Kp = _tile_pad(K, _TK_MAX, 128)
    tn, Np = _tile_pad(N, _TN_MAX, 128)
    xp = _pad2(x, Mp, Kp)
    wp = _pad2(w, Kp, Np)
    if b is None:
        bp = jnp.zeros((1, Np), jnp.float32)
    else:
        bp = _pad2(b.reshape(1, N).astype(jnp.float32), 1, Np)
    out = _matmul_call(xp, wp, bp, act=act, out_dtype=out_dtype, tm=tm, tn=tn, tk=tk)
    return out[:M, :N]


def llama_mlp(x, wg, wu, wd):
    """x: [M, H]; wg/wu: [H, I]; wd: [I, H].
    Fused gate_up matmul, then down matmul whose K loop fuses silu(gate)*up."""
    M, H = x.shape
    I = wg.shape[1]
    tm, Mp = _tile_pad(M, _TM_MAX, 8)
    tk, Hp = _tile_pad(H, _TK_MAX, 128)
    ti, Ip = _tile_pad(I, _TN_MAX, 128)

    xp = _pad2(x, Mp, Hp)
    # TODO(synk): in production the gate/up concat + padding happens at weight-load time.
    w_gu = jnp.concatenate([_pad2(wg, Hp, Ip), _pad2(wu, Hp, Ip)], axis=1)  # [Hp, 2Ip]
    zero_b = jnp.zeros((1, 2 * Ip), jnp.float32)
    gu = _matmul_call(xp, w_gu, zero_b, act="none", out_dtype=x.dtype,
                      tm=tm, tn=ti, tk=tk)                                   # [Mp, 2Ip]

    tn2, Hp2 = _tile_pad(H, _TN_MAX, 128)
    wd_p = _pad2(wd, Ip, Hp2)
    nk = Ip // ti
    out = pl.pallas_call(
        functools.partial(_down_silu_kernel, nk=nk),
        out_shape=jax.ShapeDtypeStruct((Mp, Hp2), x.dtype),
        grid=(Mp // tm, Hp2 // tn2, nk),
        in_specs=[pl.BlockSpec((tm, ti), lambda i, j, k: (i, k)),        # gate half
                  pl.BlockSpec((tm, ti), lambda i, j, k: (i, k + nk)),   # up half
                  pl.BlockSpec((ti, tn2), lambda i, j, k: (k, j))],
        out_specs=pl.BlockSpec((tm, tn2), lambda i, j, k: (i, j)),
        scratch_shapes=[pltpu.VMEM((tm, tn2), jnp.float32)],
        compiler_params=pltpu.CompilerParams(
            dimension_semantics=_MM_SEM, vmem_limit_bytes=_VMEM_LIMIT),
    )(gu, gu, wd_p)
    return out[:M, :H]


def flash_mha(q, k, v, scale, causal):
    """q,k,v: [B, H, S, D] -> [B, H, S, D] flash attention (mask built in-kernel)."""
    B, H, S, D = q.shape
    tq, Sp = _tile_pad(S, 256, 8)
    tkv = tq

    def prep(x):
        x = x.reshape(B * H, S, D)
        if Sp != S:
            x = jnp.pad(x, ((0, 0), (0, Sp - S), (0, 0)))
        return x

    qf, kf, vf = prep(q), prep(k), prep(v)
    out = pl.pallas_call(
        functools.partial(_flash_kernel, scale=scale, causal=causal,
                          kv_len=S, tq=tq, tkv=tkv),
        out_shape=jax.ShapeDtypeStruct((B * H, Sp, D), q.dtype),
        grid=(B * H, Sp // tq, Sp // tkv),
        in_specs=[pl.BlockSpec((1, tq, D), lambda i, qi, ki: (i, qi, 0)),
                  pl.BlockSpec((1, tkv, D), lambda i, qi, ki: (i, ki, 0)),
                  pl.BlockSpec((1, tkv, D), lambda i, qi, ki: (i, ki, 0))],
        out_specs=pl.BlockSpec((1, tq, D), lambda i, qi, ki: (i, qi, 0)),
        scratch_shapes=[pltpu.VMEM((tq, 1), jnp.float32),
                        pltpu.VMEM((tq, 1), jnp.float32),
                        pltpu.VMEM((tq, D), jnp.float32)],
        compiler_params=pltpu.CompilerParams(
            dimension_semantics=("parallel", "parallel", "arbitrary"),
            vmem_limit_bytes=_VMEM_LIMIT),
    )(qf, kf, vf)
    return out[:, :S, :].reshape(B, H, S, D)


def _norm_call(kernel, xf, params2d, out_dtype):
    M, H = xf.shape
    tm, Mp = _tile_pad(M, 256, 8)
    xp = jnp.pad(xf, ((0, Mp - M), (0, 0))) if Mp != M else xf
    out = pl.pallas_call(
        kernel,
        out_shape=jax.ShapeDtypeStruct((Mp, H), out_dtype),
        grid=(Mp // tm,),
        in_specs=[pl.BlockSpec((tm, H), lambda i: (i, 0))]
                 + [pl.BlockSpec((1, H), lambda i: (0, 0)) for _ in params2d],
        out_specs=pl.BlockSpec((tm, H), lambda i: (i, 0)),
        compiler_params=pltpu.CompilerParams(
            dimension_semantics=("parallel",), vmem_limit_bytes=_VMEM_LIMIT),
    )(xp, *params2d)
    return out[:M]


def layernorm(x, g, b, eps=1e-5):
    shape = x.shape
    H = shape[-1]
    out = _norm_call(functools.partial(_layernorm_kernel, eps=eps),
                     x.reshape(-1, H),
                     (g.reshape(1, H).astype(jnp.float32),
                      b.reshape(1, H).astype(jnp.float32)),
                     x.dtype)
    return out.reshape(shape)


def rmsnorm(x, g, eps=1e-6):
    shape = x.shape
    H = shape[-1]
    out = _norm_call(functools.partial(_rmsnorm_kernel, eps=eps),
                     x.reshape(-1, H),
                     (g.reshape(1, H).astype(jnp.float32),),
                     x.dtype)
    return out.reshape(shape)


def multi_modal_projector(feats, p):
    """feats: [num_images, T, Hv] -> [num_images, T, Ht] (linear -> gelu -> linear)."""
    N, T, Hv = feats.shape
    x = feats.reshape(N * T, Hv)
    h = linear(x, p["w1"], p["b1"], act="gelu")
    out = linear(h, p["w2"], p["b2"])
    return out.reshape(N, T, -1)


# ----------------------------------------------------------------------------
# Vision tower (CLIP-ViT style) and LLaMA language model
# ----------------------------------------------------------------------------
def clip_layer(h, p, cfg):
    N, S, Hv = h.shape
    nh = cfg["vision_heads"]
    dh = Hv // nh
    scale = 1.0 / math.sqrt(dh)

    res = h
    x = layernorm(h, p["ln1_g"], p["ln1_b"]).reshape(N * S, Hv)
    qkv = linear(x, p["qkv_w"], p["qkv_b"]).reshape(N, S, 3, nh, dh)
    q = qkv[:, :, 0].transpose(0, 2, 1, 3)
    k = qkv[:, :, 1].transpose(0, 2, 1, 3)
    v = qkv[:, :, 2].transpose(0, 2, 1, 3)
    o = flash_mha(q, k, v, scale, causal=False)
    o = o.transpose(0, 2, 1, 3).reshape(N * S, Hv)
    o = linear(o, p["o_w"], p["o_b"]).reshape(N, S, Hv)
    h = res + o

    res = h
    x = layernorm(h, p["ln2_g"], p["ln2_b"]).reshape(N * S, Hv)
    m = linear(x, p["fc1_w"], p["fc1_b"], act="quick_gelu")
    m = linear(m, p["fc2_w"], p["fc2_b"]).reshape(N, S, Hv)
    return res + m


def vision_tower(pixel_values, p, cfg):
    """pixel_values: NCHW [num_images, 3, image_size, image_size].
    Returns the list of hidden_states (output_hidden_states=True semantics)."""
    N, C, H, W = pixel_values.shape
    P = cfg["patch_size"]
    Hv = cfg["vision_hidden"]
    gh, gw = H // P, W // P
    # im2col: Conv2d(kernel=P, stride=P, bias=False) as matmul over flattened patches.
    x = pixel_values.reshape(N, C, gh, P, gw, P)
    x = x.transpose(0, 2, 4, 1, 3, 5).reshape(N * gh * gw, C * P * P)
    x = x.astype(p["patch_w"].dtype)
    patch_emb = linear(x, p["patch_w"], None).reshape(N, gh * gw, Hv)
    cls = jnp.broadcast_to(p["class_emb"].reshape(1, 1, Hv), (N, 1, Hv))
    h = jnp.concatenate([cls, patch_emb], axis=1) + p["pos_emb"][None]
    h = layernorm(h, p["pre_ln_g"], p["pre_ln_b"])

    hidden_states = [h]
    for lp in p["layers"]:
        h = clip_layer(h, lp, cfg)
        hidden_states.append(h)
    return hidden_states


def apply_rotary(x, positions):
    """x: [B, H, S, D], positions: [B, S] -> rotated x (LLaMA rotate_half)."""
    # TODO(synk): fuse into the attention kernel's q/k load to avoid the HBM round-trip.
    B, Hh, S, D = x.shape
    inv = 1.0 / (10000.0 ** (jnp.arange(0, D, 2, dtype=jnp.float32) / D))
    ang = positions.astype(jnp.float32)[:, :, None] * inv[None, None, :]   # [B,S,D/2]
    cos = jnp.concatenate([jnp.cos(ang), jnp.cos(ang)], axis=-1)[:, None]  # [B,1,S,D]
    sin = jnp.concatenate([jnp.sin(ang), jnp.sin(ang)], axis=-1)[:, None]
    xf = x.astype(jnp.float32)
    x1, x2 = xf[..., : D // 2], xf[..., D // 2:]
    rot = jnp.concatenate([-x2, x1], axis=-1)
    return (xf * cos + rot * sin).astype(x.dtype)


def llama_layer(h, positions, p, cfg):
    B, S, Ht = h.shape
    nh = cfg["text_heads"]
    dh = Ht // nh
    scale = 1.0 / math.sqrt(dh)

    res = h
    x = rmsnorm(h, p["in_ln"]).reshape(B * S, Ht)
    qkv = linear(x, p["qkv_w"]).reshape(B, S, 3, nh, dh)
    q = qkv[:, :, 0].transpose(0, 2, 1, 3)
    k = qkv[:, :, 1].transpose(0, 2, 1, 3)
    v = qkv[:, :, 2].transpose(0, 2, 1, 3)
    q = apply_rotary(q, positions)
    k = apply_rotary(k, positions)
    o = flash_mha(q, k, v, scale, causal=True)
    o = o.transpose(0, 2, 1, 3).reshape(B * S, Ht)
    o = linear(o, p["o_w"]).reshape(B, S, Ht)
    h = res + o

    res = h
    x = rmsnorm(h, p["post_ln"]).reshape(B * S, Ht)
    m = llama_mlp(x, p["gate_w"], p["up_w"], p["down_w"]).reshape(B, S, Ht)
    return res + m


def llama_model(inputs_embeds, positions, p, cfg):
    h = inputs_embeds
    for lp in p["layers"]:
        h = llama_layer(h, positions, lp, cfg)
    return rmsnorm(h, p["final_norm"])


# ----------------------------------------------------------------------------
# LLaVA forward
# ----------------------------------------------------------------------------
def extract_visual_features(params, cfg, pixel_values):
    """Returns a list (len == batch) of [num_img_tokens, text_hidden] features."""
    pv = jnp.concatenate([v for v in pixel_values if v is not None], axis=0)
    hidden_list = vision_tower(pv, params["vision"], cfg)
    selected = hidden_list[cfg["vision_feature_layer"]]
    if cfg["vision_feature_select_strategy"] == "default":
        selected = selected[:, 1:]          # drop CLS token
    projected = multi_modal_projector(selected, params["projector"])  # [n_img, T, Ht]
    Ht = projected.shape[-1]
    feats, off = [], 0
    for v in pixel_values:
        if v is None:
            feats.append(None)
        else:
            n = v.shape[0]
            feats.append(projected[off:off + n].reshape(-1, Ht))
            off += n
    return feats


def merge_image_features(inputs_embeds, input_ids, feats_list, image_token_index):
    merged = []
    for i in range(inputs_embeds.shape[0]):
        emb_i = inputs_embeds[i]
        f = feats_list[i]
        if f is None:
            merged.append(emb_i)
            continue
        mask = input_ids[i] == image_token_index
        idx = jnp.clip(jnp.cumsum(mask.astype(jnp.int32)) - 1, 0, f.shape[0] - 1)
        merged.append(jnp.where(mask[:, None], f[idx], emb_i))
    return jnp.stack(merged, axis=0)


def llava_forward(params, cfg, input_ids, positions, kv_caches, input_metadata,
                  image_features=None, inputs_embeds=None, pixel_values=None):
    del kv_caches, input_metadata  # TODO(synk): decode path / paged cache not translated
    if inputs_embeds is None:
        inputs_embeds = jnp.take(params["text"]["embed"], input_ids, axis=0)
        if input_ids.shape[1] != 1:
            if pixel_values is not None:
                image_features = extract_visual_features(params, cfg, pixel_values)
            if image_features is not None:
                inputs_embeds = merge_image_features(
                    inputs_embeds, input_ids, image_features, cfg["image_token_index"])
    hidden_states = llama_model(inputs_embeds, positions, params["text"], cfg)
    return hidden_states


# ----------------------------------------------------------------------------
# Deterministic parameter init (weights bf16, biases / norm params f32)
# ----------------------------------------------------------------------------
def init_params(key, cfg):
    kit = iter(jax.random.split(key, 256))

    def nrm(*shape):
        return (0.02 * jax.random.normal(next(kit), shape, dtype=jnp.float32)
                ).astype(jnp.bfloat16)

    def ones(*shape):
        return jnp.ones(shape, jnp.float32)

    def zeros(*shape):
        return jnp.zeros(shape, jnp.float32)

    Hv, Iv = cfg["vision_hidden"], cfg["vision_intermediate"]
    Ht, It = cfg["text_hidden"], cfg["text_intermediate"]
    C, P = 3, cfg["patch_size"]
    n_patches = (cfg["image_size"] // P) ** 2

    vision = dict(
        patch_w=nrm(C * P * P, Hv),
        class_emb=nrm(Hv),
        pos_emb=nrm(n_patches + 1, Hv),
        pre_ln_g=ones(Hv), pre_ln_b=zeros(Hv),
        layers=[dict(
            ln1_g=ones(Hv), ln1_b=zeros(Hv),
            qkv_w=nrm(Hv, 3 * Hv), qkv_b=zeros(3 * Hv),   # fused q/k/v (vLLM qkv_proj)
            o_w=nrm(Hv, Hv), o_b=zeros(Hv),
            ln2_g=ones(Hv), ln2_b=zeros(Hv),
            fc1_w=nrm(Hv, Iv), fc1_b=zeros(Iv),
            fc2_w=nrm(Iv, Hv), fc2_b=zeros(Hv),
        ) for _ in range(cfg["vision_layers"])],
    )
    projector = dict(w1=nrm(Hv, Ht), b1=zeros(Ht), w2=nrm(Ht, Ht), b2=zeros(Ht))
    text = dict(
        embed=nrm(cfg["vocab_size"], Ht),
        layers=[dict(
            in_ln=ones(Ht),
            qkv_w=nrm(Ht, 3 * Ht),                         # fused q/k/v
            o_w=nrm(Ht, Ht),
            post_ln=ones(Ht),
            gate_w=nrm(Ht, It), up_w=nrm(Ht, It), down_w=nrm(It, Ht),
        ) for _ in range(cfg["text_layers"])],
        final_norm=ones(Ht),
    )
    return dict(vision=vision, projector=projector, text=text)


# ----------------------------------------------------------------------------
# Main
# ----------------------------------------------------------------------------
if __name__ == "__main__":
    cfg = dict(
        image_size=16, patch_size=8,
        vision_hidden=64, vision_intermediate=128, vision_layers=2, vision_heads=4,
        text_hidden=32, text_intermediate=64, text_layers=2, text_heads=4,
        vocab_size=128, image_token_index=7,
        vision_feature_layer=-2, vision_feature_select_strategy="default",
    )
    tokens_per_image = (cfg["image_size"] // cfg["patch_size"]) ** 2  # 4 ('default')

    key = jax.random.PRNGKey(0)
    pkey, xk1, xk2 = jax.random.split(key, 3)
    params = init_params(pkey, cfg)

    B, S = 2, 8
    IMG = cfg["image_token_index"]
    # each prompt carries exactly tokens_per_image image-token placeholders
    input_ids = jnp.array(
        [[5, IMG, IMG, IMG, IMG, 10, 11, 12],
         [IMG, IMG, IMG, IMG, 3, 4, 5, 6]], dtype=jnp.int32)
    positions = jnp.broadcast_to(jnp.arange(S, dtype=jnp.int32)[None, :], (B, S))
    pixel_values = [
        jax.random.normal(xk1, (1, 3, cfg["image_size"], cfg["image_size"]), jnp.float32),
        jax.random.normal(xk2, (1, 3, cfg["image_size"], cfg["image_size"]), jnp.float32),
    ]
    kv_caches = [(None, None)] * cfg["text_layers"]

    hidden_states = llava_forward(params, cfg, input_ids, positions, kv_caches, None,
                                  pixel_values=pixel_values)
    jax.block_until_ready(hidden_states)
    assert hidden_states.shape == (B, S, cfg["text_hidden"])
    assert bool(jnp.all(jnp.isfinite(hidden_states.astype(jnp.float32))))
    print("KERNEL_OK")
</pallas_src>

<mosaic_0001>
module attributes {stable_mosaic.version = 11 : i64} {
  func.func @_matmul_kernel(%arg0: i32, %arg1: i32, %arg2: i32, %arg3: memref<8x256xbf16, #tpu.memory_space<vmem>>, %arg4: memref<256x128xbf16, #tpu.memory_space<vmem>>, %arg5: memref<1x128xf32, #tpu.memory_space<vmem>>, %arg6: memref<8x128xbf16, #tpu.memory_space<vmem>>, %arg7: memref<8x128xf32, #tpu.memory_space<vmem>>) attributes {dimension_semantics = [#tpu.dimension_semantics<parallel>, #tpu.dimension_semantics<parallel>, #tpu.dimension_semantics<arbitrary>], iteration_bounds = array<i64: 1, 1, 1>, scalar_prefetch = 0 : i64, scratch_operands = 1 : i64, tpu.core_type = #tpu.core_type<tc>, window_params = [{transform_indices = @transform_0, window_bounds = array<i64: 8, 256>}, {transform_indices = @transform_1, window_bounds = array<i64: 256, 128>}, {transform_indices = @transform_2, window_bounds = array<i64: 1, 128>}, {transform_indices = @transform_3, window_bounds = array<i64: 8, 128>}]} {
    %c0_i32 = arith.constant 0 : i32
    %0 = arith.cmpi eq, %arg2, %c0_i32 : i32
    %1 = arith.extui %0 : i1 to i32
    %c0_i32_0 = arith.constant 0 : i32
    %2 = arith.cmpi ne, %1, %c0_i32_0 : i32
    scf.if %2 {
      %cst_10 = arith.constant 0.000000e+00 : f32
      %12 = vector.broadcast %cst_10 : f32 to vector<8x128xf32>
      %c0_11 = arith.constant 0 : index
      %c0_12 = arith.constant 0 : index
      %13 = vector.load %arg7[%c0_11, %c0_12] : memref<8x128xf32, #tpu.memory_space<vmem>>, vector<8x128xf32>
      tpu.vector_store %arg7[%c0_11, %c0_12], %12 {strides = array<i32>} : memref<8x128xf32, #tpu.memory_space<vmem>>, vector<8x128xf32>,
    } else {
    }
    %c0 = arith.constant 0 : index
    %c0_1 = arith.constant 0 : index
    %3 = vector.load %arg7[%c0, %c0_1] : memref<8x128xf32, #tpu.memory_space<vmem>>, vector<8x128xf32>
    %c0_2 = arith.constant 0 : index
    %c0_3 = arith.constant 0 : index
    %4 = vector.load %arg3[%c0_2, %c0_3] : memref<8x256xbf16, #tpu.memory_space<vmem>>, vector<8x256xbf16>
    %c0_4 = arith.constant 0 : index
    %c0_5 = arith.constant 0 : index
    %5 = vector.load %arg4[%c0_4, %c0_5] : memref<256x128xbf16, #tpu.memory_space<vmem>>, vector<256x128xbf16>
    %cst = arith.constant dense<0.000000e+00> : vector<8x128xf32>
    %6 = tpu.matmul %4, %5, %cst {dimension_numbers = #tpu.dot_dimension_numbers<[1], [0], [0], [1], [0, 0, 1, 1], [], []>} : vector<8x256xbf16>, vector<256x128xbf16>, vector<8x128xf32> -> vector<8x128xf32>
    %7 = arith.addf %3, %6 : vector<8x128xf32>
    %c0_6 = arith.constant 0 : index
    %c0_7 = arith.constant 0 : index
    %8 = vector.load %arg7[%c0_6, %c0_7] : memref<8x128xf32, #tpu.memory_space<vmem>>, vector<8x128xf32>
    tpu.vector_store %arg7[%c0_6, %c0_7], %7 {strides = array<i32>} : memref<8x128xf32, #tpu.memory_space<vmem>>, vector<8x128xf32>,
    %c0_i32_8 = arith.constant 0 : i32
    %9 = arith.cmpi eq, %arg2, %c0_i32_8 : i32
    %10 = arith.extui %9 : i1 to i32
    %c0_i32_9 = arith.constant 0 : i32
    %11 = arith.cmpi ne, %10, %c0_i32_9 : i32
    scf.if %11 {
      %c0_10 = arith.constant 0 : index
      %c0_11 = arith.constant 0 : index
      %12 = vector.load %arg7[%c0_10, %c0_11] : memref<8x128xf32, #tpu.memory_space<vmem>>, vector<8x128xf32>
      %c0_12 = arith.constant 0 : index
      %c0_13 = arith.constant 0 : index
      %13 = vector.load %arg5[%c0_12, %c0_13] : memref<1x128xf32, #tpu.memory_space<vmem>>, vector<1x128xf32>
      %14 = vector.broadcast %13 : vector<1x128xf32> to vector<8x128xf32>
      %15 = arith.addf %12, %14 : vector<8x128xf32>
      %16 = arith.truncf %15 : vector<8x128xf32> to vector<8x128xbf16>
      %c0_14 = arith.constant 0 : index
      %c0_15 = arith.constant 0 : index
      %17 = vector.load %arg6[%c0_14, %c0_15] : memref<8x128xbf16, #tpu.memory_space<vmem>>, vector<8x128xbf16>
      tpu.vector_store %arg6[%c0_14, %c0_15], %16 {strides = array<i32>} : memref<8x128xbf16, #tpu.memory_space<vmem>>, vector<8x128xbf16>,
    } else {
    }
    return
  }
  func.func @transform_0(%arg0: i32, %arg1: i32, %arg2: i32) -> (i32, i32) {
    %c0_i32 = arith.constant 0 : i32
    return %arg0, %arg2 : i32, i32
  }
  func.func @transform_1(%arg0: i32, %arg1: i32, %arg2: i32) -> (i32, i32) {
    %c0_i32 = arith.constant 0 : i32
    return %arg2, %arg1 : i32, i32
  }
  func.func @transform_2(%arg0: i32, %arg1: i32, %arg2: i32) -> (i32, i32) {
    %c0_i32 = arith.constant 0 : i32
    %c0_i32_0 = arith.constant 0 : i32
    return %c0_i32, %arg1 : i32, i32
  }
  func.func @transform_3(%arg0: i32, %arg1: i32, %arg2: i32) -> (i32, i32) {
    %c0_i32 = arith.constant 0 : i32
    return %arg0, %arg1 : i32, i32
  }
}

</mosaic_0001>

<llo_original>
// kernel: tpu_custom_call.1
$region0: #{tpu_custom_call.1}
  #allocation0 [shape = 'u32[]', space=smem, size = 0x4, offset = 0x4, fixed_abs, tag = 'smem constant byte address 0x4 - core index']
  #allocation1 [shape = 'u32[144,128]{1,0:T(1,128)}', space=vmem, size = 0x12000, scoped, tag = 'internal scratch']
  #allocation2 [shape = 'f32[8,128]{1,0:T(8,128)}', space=vmem, size = 0x1000, scoped, tag = 'scratch operand']
  %s0 = inlined_call_operand.hbm [shape: bf16[8,256], index: 0, kind: input, shape index: {}]
  %s1 = inlined_call_operand.hbm [shape: bf16[256,128], index: 1, kind: input, shape index: {}]
  %s2 = inlined_call_operand.vmem [shape: f32[1,128], index: 2, kind: input, shape index: {}]
  %s3 = inlined_call_operand.hbm [shape: bf16[8,128], index: 3, kind: output, shape index: {}]
  %s4 = sld [smem:[#allocation0]]
  $region38: #{tpu_custom_call.1} parent=0
    _
  %s6 = ssub.s32 1, %s4
  %s7 = scalar_select 0, %s6, %s4
  $region1: #{tpu_custom_call.1} parent=0
    #allocation3 [shape = 'u8[4096]{0}', space=vmem, size = 0x1000, scoped, tag = 'input window, operand 0, single buffered']
    #allocation4 [shape = 's32[1]{0}', space=sflag, size = 0x4, scoped, tag = 'scoped memory for tpu_custom_call.1']
    #allocation5 [shape = 's32[1]{0}', space=sflag, size = 0x4, scoped, tag = 'scoped memory for tpu_custom_call.1']
    #allocation6 [shape = 'u8[65536]{0}', space=vmem, size = 0x10000, scoped, tag = 'input window, operand 1, single buffered']
    #allocation7 [shape = 's32[1]{0}', space=sflag, size = 0x4, scoped, tag = 'scoped memory for tpu_custom_call.1']
    #allocation8 [shape = 'u8[2048]{0}', space=vmem, size = 0x800, scoped, tag = 'output window, operand 0, single buffered']
    %8 = vsyncpa [#allocation4], 0
    %9 = vsyncpa [#allocation7], 0
    %10 = vsyncpa [#allocation5], 0
    // Predicated region
    $region2: #{tpu_custom_call.1} parent=1 // pred_check
      _
    $region3: #{tpu_custom_call.1} parent=1 // pred_check_branch
      %12 = sbr.rel (0) target = $region5
    $region4: #{tpu_custom_call.1} parent=1 // pred_region
      %s14 = ssub.s32 128, 128
      %15 = vsyncadd [#allocation4], %s14
      %s17 = sshll.u32 [#allocation3], 4
      %s18 = int_to_ptr.vmem [resolvable:$true] %s17
      %20 = dma.hbm_to_vmem [thread:$0]  %s0, 128, %s18, [#allocation4]
    $region5: #{tpu_custom_call.1} parent=1 // pred_fallthru
      _
    // Predicated region
    $region6: #{tpu_custom_call.1} parent=1 // pred_check
      _
    $region7: #{tpu_custom_call.1} parent=1 // pred_check_branch
      %22 = sbr.rel (0) target = $region9
    $region8: #{tpu_custom_call.1} parent=1 // pred_region
      %s24 = ssub.s32 2048, 2048
      %25 = vsyncadd [#allocation7], %s24
      %s26 = sshll.u32 [#allocation6], 4
      %s27 = int_to_ptr.vmem [resolvable:$true] %s26
      %32 = dma.hbm_to_vmem [thread:$0]  %s1, 2048, %s27, [#allocation7], 64, 64, 4
    $region9: #{tpu_custom_call.1} parent=1 // pred_fallthru
      _
    // Predicated region
    $region10: #{tpu_custom_call.1} parent=1 // pred_check
      _
    $region11: #{tpu_custom_call.1} parent=1 // pred_check_branch
      %34 = sbr.rel (0) target = $region13
    $region12: #{tpu_custom_call.1} parent=1 // pred_region
      _
    $region13: #{tpu_custom_call.1} parent=1 // pred_fallthru
      _
    // Predicated region
    $region14: #{tpu_custom_call.1} parent=1 // pred_check
      _
    $region15: #{tpu_custom_call.1} parent=1 // pred_check_branch
      %36 = sbr.rel (0) target = $region17
    $region16: #{tpu_custom_call.1} parent=1 // pred_region
      %37 = dma.done [#allocation4], 128
    $region17: #{tpu_custom_call.1} parent=1 // pred_fallthru
      _
    // Predicated region
    $region18: #{tpu_custom_call.1} parent=1 // pred_check
      _
    $region19: #{tpu_custom_call.1} parent=1 // pred_check_branch
      %39 = sbr.rel (0) target = $region21
    $region20: #{tpu_custom_call.1} parent=1 // pred_region
      %40 = dma.done [#allocation7], 2048
    $region21: #{tpu_custom_call.1} parent=1 // pred_fallthru
      _
    %p42 = scmp.eq.s32.totalorder 0, 0
    // Predicated region
    $region22: #{tpu_custom_call.1} parent=1 // pred_check
      %p43 = pneg %p42
    $region23: #{tpu_custom_call.1} parent=1 // pred_check_branch
      %45 = sbr.rel (%p43) target = $region25
    $region24: #{tpu_custom_call.1} parent=1 // pred_region
      %46 = vst [vmem:[#allocation2] sm:$0xff] 0.0
    $region25: #{tpu_custom_call.1} parent=1 // pred_fallthru
      _
    %v47 = vld [vmem:[#allocation2] sm:$0xff]
    %v48 = vld [vmem:[#allocation3] sm:$0xff]
    %v49 = vld [vmem:[#allocation6] sm:$0xf]
    %v50 = vld [vmem:[#allocation6 + $0x4] sm:$0xf]
    %v51 = vld [vmem:[#allocation6 + $0x8] sm:$0xf]
    %v52 = vld [vmem:[#allocation6 + $0xc] sm:$0xf]
    %v53 = vld [vmem:[#allocation6 + $0x10] sm:$0xf]
    %v54 = vld [vmem:[#allocation6 + $0x14] sm:$0xf]
    %v55 = vld [vmem:[#allocation6 + $0x18] sm:$0xf]
    %v56 = vld [vmem:[#allocation6 + $0x1c] sm:$0xf]
    %v57 = vld [vmem:[#allocation6 + $0x20] sm:$0xf]
    %v58 = vld [vmem:[#allocation6 + $0x24] sm:$0xf]
    %v59 = vld [vmem:[#allocation6 + $0x28] sm:$0xf]
    %v60 = vld [vmem:[#allocation6 + $0x2c] sm:$0xf]
    %v61 = vld [vmem:[#allocation6 + $0x30] sm:$0xf]
    %v62 = vld [vmem:[#allocation6 + $0x34] sm:$0xf]
    %v63 = vld [vmem:[#allocation6 + $0x38] sm:$0xf]
    %v64 = vld [vmem:[#allocation6 + $0x3c] sm:$0xf]
    %v65 = vld [vmem:[#allocation6 + $0x40] sm:$0xf]
    %v66 = vld [vmem:[#allocation6 + $0x44] sm:$0xf]
    %v67 = vld [vmem:[#allocation6 + $0x48] sm:$0xf]
    %v68 = vld [vmem:[#allocation6 + $0x4c] sm:$0xf]
    %v69 = vld [vmem:[#allocation6 + $0x50] sm:$0xf]
    %v70 = vld [vmem:[#allocation6 + $0x54] sm:$0xf]
    %v71 = vld [vmem:[#allocation6 + $0x58] sm:$0xf]
    %v72 = vld [vmem:[#allocation6 + $0x5c] sm:$0xf]
    %v73 = vld [vmem:[#allocation6 + $0x60] sm:$0xf]
    %v74 = vld [vmem:[#allocation6 + $0x64] sm:$0xf]
    %v75 = vld [vmem:[#allocation6 + $0x68] sm:$0xf]
    %v76 = vld [vmem:[#allocation6 + $0x6c] sm:$0xf]
    %v77 = vld [vmem:[#allocation6 + $0x70] sm:$0xf]
    %v78 = vld [vmem:[#allocation6 + $0x74] sm:$0xf]
    %v79 = vld [vmem:[#allocation6 + $0x78] sm:$0xf]
    %v80 = vld [vmem:[#allocation6 + $0x7c] sm:$0xf]
    %v82 = vunpack.c.l.b16 %v48
    %v83 = vunpack.c.h.b16 %v48
    %v84 = vpack.c.b16 %v82, %v82
    %v85 = vpack.c.b16 %v83, %v83
    %v120 = vunpack.c.l.b16 %v49
    %v121 = vunpack.c.l.b16 %v50
    %v122 = vunpack.c.l.b16 %v51
    %v123 = vunpack.c.l.b16 %v52
    %v124 = vunpack.c.l.b16 %v53
    %v125 = vunpack.c.l.b16 %v54
    %v126 = vunpack.c.l.b16 %v55
    %v127 = vunpack.c.l.b16 %v56
    %v128 = vunpack.c.l.b16 %v57
    %v129 = vunpack.c.l.b16 %v58
    %v130 = vunpack.c.l.b16 %v59
    %v131 = vunpack.c.l.b16 %v60
    %v132 = vunpack.c.l.b16 %v61
    %v133 = vunpack.c.l.b16 %v62
    %v134 = vunpack.c.l.b16 %v63
    %v135 = vunpack.c.l.b16 %v64
    %v136 = vunpack.c.l.b16 %v65
    %v137 = vunpack.c.l.b16 %v66
    %v138 = vunpack.c.l.b16 %v67
    %v139 = vunpack.c.l.b16 %v68
    %v140 = vunpack.c.l.b16 %v69
    %v141 = vunpack.c.l.b16 %v70
    %v142 = vunpack.c.l.b16 %v71
    %v143 = vunpack.c.l.b16 %v72
    %v144 = vunpack.c.l.b16 %v73
    %v145 = vunpack.c.l.b16 %v74
    %v146 = vunpack.c.l.b16 %v75
    %v147 = vunpack.c.l.b16 %v76
    %v148 = vunpack.c.l.b16 %v77
    %v149 = vunpack.c.l.b16 %v78
    %v150 = vunpack.c.l.b16 %v79
    %v151 = vunpack.c.l.b16 %v80
    %v152 = vpack.c.b16 %v121, %v120
    %v153 = vpack.c.b16 %v123, %v122
    %v154 = vpack.c.b16 %v125, %v124
    %v155 = vpack.c.b16 %v127, %v126
    %v156 = vpack.c.b16 %v129, %v128
    %v157 = vpack.c.b16 %v131, %v130
    %v158 = vpack.c.b16 %v133, %v132
    %v159 = vpack.c.b16 %v135, %v134
    %v160 = vpack.c.b16 %v137, %v136
    %v161 = vpack.c.b16 %v139, %v138
    %v162 = vpack.c.b16 %v141, %v140
    %v163 = vpack.c.b16 %v143, %v142
    %v164 = vpack.c.b16 %v145, %v144
    %v165 = vpack.c.b16 %v147, %v146
    %v166 = vpack.c.b16 %v149, %v148
    %v167 = vpack.c.b16 %v151, %v150
    %184 = vmatprep.subr.bf16.mxu0 0
    %185 = vmatpush1.bf16.msra.mxu0 %v152
    %186 = vmatprep.subr.bf16.mxu0 0
    %187 = vmatpush1.bf16.msra.mxu0 %v153
    %188 = vmatprep.subr.bf16.mxu0 0
    %189 = vmatpush1.bf16.msra.mxu0 %v154
    %190 = vmatprep.subr.bf16.mxu0 0
    %191 = vmatpush1.bf16.msra.mxu0 %v155
    %192 = vmatprep.subr.bf16.mxu0 0
    %193 = vmatpush1.bf16.msra.mxu0 %v156
    %194 = vmatprep.subr.bf16.mxu0 0
    %195 = vmatpush1.bf16.msra.mxu0 %v157
    %196 = vmatprep.subr.bf16.mxu0 0
    %197 = vmatpush1.bf16.msra.mxu0 %v158
    %198 = vmatprep.subr.bf16.mxu0 0
    %199 = vmatpush1.bf16.msra.mxu0 %v159
    %200 = vmatprep.subr.bf16.mxu0 0
    %201 = vmatpush1.bf16.msra.mxu0 %v160
    %202 = vmatprep.subr.bf16.mxu0 0
    %203 = vmatpush1.bf16.msra.mxu0 %v161
    %204 = vmatprep.subr.bf16.mxu0 0
    %205 = vmatpush1.bf16.msra.mxu0 %v162
    %206 = vmatprep.subr.bf16.mxu0 0
    %207 = vmatpush1.bf16.msra.mxu0 %v163
    %208 = vmatprep.subr.bf16.mxu0 0
    %209 = vmatpush1.bf16.msra.mxu0 %v164
    %210 = vmatprep.subr.bf16.mxu0 0
    %211 = vmatpush1.bf16.msra.mxu0 %v165
    %212 = vmatprep.subr.bf16.mxu0 0
    %213 = vmatpush1.bf16.msra.mxu0 %v166
    %214 = vmatprep.subr.bf16.mxu0 0
    %215 = vmatpush1.bf16.msra.mxu0 %v167
    %216 = vmatprep.mubr.bf16.mxu0 %v85
    %217 = vmatmul.mubr.bf16.gmra.mrb[0].mxu0 %v84
    %v218 = vpop.f32.mrb[0].mxu0
    %v219 = vadd.f32 0.0, %v218
    %v220 = vpop.f32.mrb[0].mxu0
    %v221 = vpop.f32.mrb[0].mxu0
    %v222 = vpop.f32.mrb[0].mxu0
    %223 = vdwg.mxu0
    %v224 = vadd.f32 %v47, %v219
    %225 = vst [vmem:[#allocation2] sm:$0xff] %v224
    // Predicated region
    $region26: #{tpu_custom_call.1} parent=1 // pred_check
      %p226 = pneg %p42
    $region27: #{tpu_custom_call.1} parent=1 // pred_check_branch
      %228 = sbr.rel (%p226) target = $region29
    $region28: #{tpu_custom_call.1} parent=1 // pred_region
      %v229 = vld [vmem:[#allocation2] sm:$0xff]
      %v230 = vld [vmem:[%s2] sm:$0x1]
      %v232 = vlaneseq
      %v233 = vshrl.u32 %v232, 7
      %v234 = vsub.s32 0, %v233
      %v235 = vrot.slane %v230, %v234
      %v237 = vadd.f32 %v229, %v235
      %v238 = vpack.c.bf16 %v237, %v237
      %239 = vst [vmem:[#allocation8] sm:$0xf] %v238
    $region29: #{tpu_custom_call.1} parent=1 // pred_fallthru
      _
    // Predicated region
    $region30: #{tpu_custom_call.1} parent=1 // pred_check
      _
    $region31: #{tpu_custom_call.1} parent=1 // pred_check_branch
      %241 = sbr.rel (0) target = $region33
    $region32: #{tpu_custom_call.1} parent=1 // pred_region
      %s243 = ssub.s32 64, 64
      %244 = vsyncadd [#allocation5], %s243
      %s246 = sshll.u32 [#allocation8], 4
      %s247 = int_to_ptr.vmem [resolvable:$true] %s246
      %249 = dma.vmem_to_hbm [thread:$0]  %s247, 64, %s3, [#allocation5]
    $region33: #{tpu_custom_call.1} parent=1 // pred_fallthru
      _
    // Predicated region
    $region34: #{tpu_custom_call.1} parent=1 // pred_check
      _
    $region35: #{tpu_custom_call.1} parent=1 // pred_check_branch
      %251 = sbr.rel (0) target = $region37
    $region36: #{tpu_custom_call.1} parent=1 // pred_region
      %252 = dma.done [#allocation5], 64
    $region37: #{tpu_custom_call.1} parent=1 // pred_fallthru
      _
    %253 = vsyncpa [#allocation4], 1
    %254 = vsyncpa [#allocation7], 1
    %255 = vsyncpa [#allocation5], 1

</llo_original>
